<compile_context>
chip_gen: v6e
topology: v6e:2x2x1
jax: 0.10.0
libtpu: 0.0.40
codegen_flags: <defaults>
</compile_context>

<pallas_src>
from functools import partial

import jax
import jax.numpy as jnp
from jax.experimental import pallas as pl
from jax.experimental.pallas import tpu as pltpu


def _round_up(v, m):
    return (v + m - 1) // m * m


def _pad_to(a, shape):
    pads = [(0, t - s) for s, t in zip(a.shape, shape)]
    if any(p[1] for p in pads):
        a = jnp.pad(a, pads)
    return a


def rel_graph_conv_kernel(nnz_ref, fr_ref, fd_ref, fs_ref,
                          adj_ref, invdeg_ref, xsrc_ref, xdst_ref,
                          w_ref, loopw_ref, bias_ref, o_ref, *, apply_relu):
    """Grid = (dst_tiles [parallel], src_tiles [arbitrary], relations [arbitrary]).

    The output block index only depends on the destination-tile axis, so o_ref stays
    resident in VMEM across the whole (source, relation) reduction and doubles as the
    f32 accumulator (no scratch).
    """
    d = pl.program_id(0)
    s = pl.program_id(1)
    r = pl.program_id(2)
    n_s = pl.num_programs(1)
    n_r = pl.num_programs(2)

    # First step for this destination tile: fold self-loop + bias into the init
    # (no zeros-init + epilogue matmul).
    @pl.when(jnp.logical_and(s == 0, r == 0))
    def _init():
        o_ref[...] = (
            jnp.dot(xdst_ref[...], loopw_ref[...], preferred_element_type=jnp.float32)
            + bias_ref[...])

    # Block-sparse skip: adjacency blocks with no edges contribute nothing.  Their DMA
    # was already avoided by the data-dependent index_map (it re-points at the block
    # fetched in the previous grid step so the pipeline skips the copy).
    step = (d * n_s + s) * n_r + r
    @pl.when(nnz_ref[step] != 0)
    def _accumulate():
        a = adj_ref[...].astype(jnp.bfloat16)        # int8 {0,1} -> bf16 (VPU, exact)
        agg = jnp.dot(a, xsrc_ref[...], preferred_element_type=jnp.float32)
        # GraphConv(norm='right'): scale by precomputed f32 1/clamp(in_deg, 1)
        # (hoisted out of the kernel: no row-reduce / divide, no bf16 degree error).
        o_ref[...] += (
            jnp.dot(agg.astype(jnp.bfloat16), w_ref[...],
                    preferred_element_type=jnp.float32)
            * invdeg_ref[...])

    if apply_relu:
        @pl.when(jnp.logical_and(s == n_s - 1, r == n_r - 1))
        def _finalize():
            o_ref[...] = jnp.maximum(o_ref[...], 0.0)
    # TODO(synk): dropout is identity in eval mode; batchnorm branch is disabled in the module.


def _pick_dst_tile(n_nodes, requested):
    # Multiple of 8; keep >= 4 destination tiles and an even tile count so the
    # 'parallel' axis load-balances across 2 TensorCores (v7x megacore).
    t = max(8, min(_round_up(requested, 8), _round_up(n_nodes, 8)))
    while t > 8 and pl.cdiv(n_nodes, t) < 4:
        t -= 8
    while t > 8 and pl.cdiv(n_nodes, t) % 2 != 0:
        t -= 8
    return t


def rel_graph_conv(adj, x, weight, loop_weight, bias, *, apply_relu=True,
                   tile_d=None, tile_s=None):
    """adj: (R, N, N) f32 {0,1}, x: (N, in), weight: (R, in, out),
    loop_weight: (in, out), bias: (out,) or (1, out).  Returns (N, out) f32."""
    R, N, _ = adj.shape
    in_feat = x.shape[1]
    out_feat = weight.shape[2]

    # Physical VMEM per core (v5e/v6e: 128 MiB, v7x: 64 MiB); conservative fallback.
    try:
        vmem_cap = int(pltpu.get_tpu_info().vmem_capacity_bytes)
    except Exception:
        vmem_cap = 64 * 2 ** 20

    if tile_d is None:
        tile_d = 256 if vmem_cap <= 64 * 2 ** 20 else 512
    if tile_s is None:
        tile_s = 4096 if vmem_cap <= 64 * 2 ** 20 else 2048

    # ---- plain-JAX preprocessing (cheap relative to the O(R*N^2) hot path) ----
    # Exact f32 inverse in-degree BEFORE any downcast.
    inv_deg = 1.0 / jnp.maximum(jnp.sum(adj, axis=-1, keepdims=True), 1.0)  # (R, N, 1)

    in_p = _round_up(in_feat, 128)
    out_p = _round_up(out_feat, 128)

    tile_d = _pick_dst_tile(N, tile_d)
    n_d = pl.cdiv(N, tile_d)
    n_pd = n_d * tile_d

    tile_s = max(128, min(_round_up(tile_s, 128), _round_up(N, 128)))
    n_s = pl.cdiv(N, tile_s)
    n_ps = n_s * tile_s

    # int8 adjacency (exactly 0/1 -> lossless); cast to bf16 on the VPU in-kernel.
    # TODO(synk): on v7x an fp8(e4m3) adjacency could feed the MXU with no in-kernel
    # cast; for real graphs replace the dense (R,N,N) stack with CSR/edge-list gather.
    adj_p = _pad_to(adj, (R, n_pd, n_ps)).astype(jnp.int8)
    xsrc_p = _pad_to(x, (n_ps, in_p)).astype(jnp.bfloat16)
    xdst_p = _pad_to(x, (n_pd, in_p)).astype(jnp.bfloat16)
    w_p = _pad_to(weight, (R, in_p, out_p)).astype(jnp.bfloat16)
    lw_p = _pad_to(loop_weight, (in_p, out_p)).astype(jnp.bfloat16)
    b_p = _pad_to(bias.reshape(1, -1), (1, out_p)).astype(jnp.float32)
    invdeg_p = _pad_to(inv_deg, (R, n_pd, 1)).astype(jnp.float32)

    # ---- block-sparsity metadata (scalar-prefetched into SMEM) ----
    # nnz[t]       : 1 iff the adjacency block visited at grid step t has any edge
    # fetch_{r,d,s}: adjacency block index to DMA at grid step t; empty blocks inherit
    #                the previously fetched block index so their copy is deduped away.
    blk_nnz = (adj_p.reshape(R, n_d, tile_d, n_s, tile_s) != 0).any(axis=(2, 4))
    mask_exec = jnp.transpose(blk_nnz, (1, 2, 0)).reshape(-1)        # (d, s, r) grid order
    t_ids = jnp.arange(mask_exec.shape[0], dtype=jnp.int32)
    last_nz = jnp.maximum(
        jax.lax.cummax(jnp.where(mask_exec, t_ids, -1), axis=0), 0)
    nnz = mask_exec.astype(jnp.int32)
    fetch_r = (last_nz % R).astype(jnp.int32)
    fetch_s = ((last_nz // R) % n_s).astype(jnp.int32)
    fetch_d = (last_nz // (R * n_s)).astype(jnp.int32)

    def adj_index_map(d, s, r, nnz_ref, fr_ref, fd_ref, fs_ref):
        t = (d * n_s + s) * R + r
        return fr_ref[t], fd_ref[t], fs_ref[t]

    # Advisory cost (dense upper bound; real work shrinks with block sparsity).
    flops_dense = (n_d * n_s * R * 2 * tile_d * tile_s * in_p
                   + n_d * n_s * R * 2 * tile_d * in_p * out_p
                   + n_d * 2 * tile_d * in_p * out_p)
    bytes_est = (adj_p.size                                # int8 adjacency stream
                 + n_d * n_ps * in_p * 2                   # X source stream (per dst tile)
                 + n_pd * in_p * 2                         # X destination stream
                 + n_d * n_s * R * (in_p * out_p * 2 + tile_d * 4)  # W_r + inv-degree
                 + in_p * out_p * 2 + out_p * 4            # loop weight + bias
                 + n_pd * out_p * 4)                       # output
    cost = pl.CostEstimate(flops=int(flops_dense), transcendentals=0,
                           bytes_accessed=int(bytes_est))

    # Honest VMEM estimate: double-buffered streams, lane-padded inv-degree block,
    # double-buffered output tile.  No VMEM term scales with N anymore.
    vmem_est = (2 * tile_d * tile_s * 1      # adj block (int8)
                + 2 * tile_s * in_p * 2      # X source block
                + 2 * tile_d * in_p * 2      # X destination block
                + 2 * tile_d * 128 * 4       # inv-degree block (lane-pads to 128)
                + 2 * in_p * out_p * 2       # W_r
                + 2 * in_p * out_p * 2       # loop weight (constant, still 2 bufs)
                + 2 * 8 * out_p * 4          # bias
                + 2 * tile_d * out_p * 4)    # output tile (double buffered)
    # ~50% headroom for compiler-internal scratch, clamped to ~82% of physical VMEM
    # (~52 MiB on v7x's 64 MiB, ~105 MiB of v5e/v6e's 128 MiB).
    vmem_limit = int(min(max(int(1.5 * vmem_est), 16 * 2 ** 20),
                         int(0.82 * vmem_cap)))

    kernel = partial(rel_graph_conv_kernel, apply_relu=apply_relu)

    out = pl.pallas_call(
        kernel,
        out_shape=jax.ShapeDtypeStruct((n_pd, out_p), jnp.float32),
        grid_spec=pltpu.PrefetchScalarGridSpec(
            num_scalar_prefetch=4,
            grid=(n_d, n_s, R),   # dst tiles [parallel]; src tiles / relations reduce
            in_specs=[
                # adjacency block (dominant HBM stream), data-dependent index map.
                pl.BlockSpec((pl.Squeezed(), tile_d, tile_s), adj_index_map),
                pl.BlockSpec((pl.Squeezed(), tile_d, 1),
                             lambda d, s, r, *_: (r, d, 0)),            # inv-degree
                pl.BlockSpec((tile_s, in_p), lambda d, s, r, *_: (s, 0)),  # X (source)
                pl.BlockSpec((tile_d, in_p), lambda d, s, r, *_: (d, 0)),  # X (dest)
                pl.BlockSpec((pl.Squeezed(), in_p, out_p),
                             lambda d, s, r, *_: (r, 0, 0)),             # W_r
                pl.BlockSpec((in_p, out_p), lambda d, s, r, *_: (0, 0)),  # loop weight
                pl.BlockSpec((1, out_p), lambda d, s, r, *_: (0, 0)),     # bias
            ],
            out_specs=pl.BlockSpec((tile_d, out_p), lambda d, s, r, *_: (d, 0)),
        ),
        compiler_params=pltpu.CompilerParams(
            dimension_semantics=("parallel", "arbitrary", "arbitrary"),
            vmem_limit_bytes=vmem_limit),
        cost_estimate=cost,
    )(nnz, fetch_r, fetch_d, fetch_s,
      adj_p, invdeg_p, xsrc_p, xdst_p, w_p, lw_p, b_p)

    return out[:N, :out_feat]


def xavier_uniform(key, shape, gain):
    # matches torch.nn.init.xavier_uniform_ fan computation for 2D/3D tensors
    if len(shape) == 2:
        fan_in, fan_out = shape[0], shape[1]
    else:  # (R, in, out): receptive field = out
        fan_in, fan_out = shape[1] * shape[2], shape[0] * shape[2]
    limit = gain * (6.0 / (fan_in + fan_out)) ** 0.5
    return jax.random.uniform(key, shape, jnp.float32, -limit, limit)


def reference(adj, x, weight, loop_weight, bias, apply_relu):
    deg = jnp.maximum(adj.sum(-1, keepdims=True), 1.0)                 # (R, N, 1)
    agg = jnp.einsum('rds,sf->rdf', adj, x)                            # aggregate
    msgs = jnp.einsum('rdf,rfo->rdo', agg, weight) / deg               # weight + right-norm
    h = msgs.sum(0) + x @ loop_weight + bias.reshape(1, -1)
    if apply_relu:
        h = jnp.maximum(h, 0.0)
    return h


if __name__ == "__main__":
    # Small synthetic RGCN setup: single node type, 3 relations, basis decomposition.
    # Shapes exercise lane padding (48/80 -> 128), destination tiling, source tiling
    # and the block-sparsity metadata path.
    N = 100
    IN_FEAT = 48
    OUT_FEAT = 80
    REL_NAMES = ("writes", "cites", "affiliated")
    R = len(REL_NAMES)
    NUM_BASES = 2          # < R  -> use_basis = True
    GAIN = 2.0 ** 0.5      # nn.init.calculate_gain('relu')

    key = jax.random.PRNGKey(0)
    k_adj, k_x, k_basis, k_comp, k_loop = jax.random.split(key, 5)

    # random sparse-ish adjacency per relation (dense representation)
    adj = (jax.random.uniform(k_adj, (R, N, N)) < 0.1).astype(jnp.float32)
    x = jax.random.normal(k_x, (N, IN_FEAT), jnp.float32)

    # WeightBasis: per-relation weight = sum_b coef[r,b] * basis[b]  (plain-JAX glue)
    basis = xavier_uniform(k_basis, (NUM_BASES, IN_FEAT, OUT_FEAT), GAIN)
    w_comp = xavier_uniform(k_comp, (R, NUM_BASES), 1.0)
    weight = jnp.einsum('rb,bio->rio', w_comp, basis)

    loop_weight = xavier_uniform(k_loop, (IN_FEAT, OUT_FEAT), GAIN)
    h_bias = jnp.zeros((OUT_FEAT,), jnp.float32)   # nn.init.zeros_

    out = rel_graph_conv(adj, x, weight, loop_weight, h_bias, apply_relu=True)
    out = jax.block_until_ready(out)

    ref = reference(adj, x, weight, loop_weight, h_bias, apply_relu=True)
    assert out.shape == (N, OUT_FEAT)
    # bf16 operands with f32 accumulation vs a pure-f32 reference -> ~1e-2 abs error.
    err = float(jnp.max(jnp.abs(out - ref)))
    assert jnp.allclose(out, ref, atol=5e-2, rtol=5e-2), f"max abs err {err}"

    print("KERNEL_OK")
</pallas_src>

<mosaic_0001>
module attributes {stable_mosaic.version = 11 : i64} {
  func.func @rel_graph_conv_kernel(%arg0: i32, %arg1: i32, %arg2: i32, %arg3: memref<12xi32, #tpu.memory_space<smem>>, %arg4: memref<12xi32, #tpu.memory_space<smem>>, %arg5: memref<12xi32, #tpu.memory_space<smem>>, %arg6: memref<12xi32, #tpu.memory_space<smem>>, %arg7: memref<1x32x128xi8, #tpu.memory_space<vmem>>, %arg8: memref<1x32x1xf32, #tpu.memory_space<vmem>>, %arg9: memref<128x128xbf16, #tpu.memory_space<vmem>>, %arg10: memref<32x128xbf16, #tpu.memory_space<vmem>>, %arg11: memref<1x128x128xbf16, #tpu.memory_space<vmem>>, %arg12: memref<128x128xbf16, #tpu.memory_space<vmem>>, %arg13: memref<1x128xf32, #tpu.memory_space<vmem>>, %arg14: memref<32x128xf32, #tpu.memory_space<vmem>>) attributes {dimension_semantics = [#tpu.dimension_semantics<parallel>, #tpu.dimension_semantics<arbitrary>, #tpu.dimension_semantics<arbitrary>], iteration_bounds = array<i64: 4, 1, 3>, scalar_prefetch = 4 : i64, scratch_operands = 0 : i64, tpu.core_type = #tpu.core_type<tc>, window_params = [{transform_indices = @transform_0, window_bounds = array<i64: 1, 32, 128>}, {transform_indices = @transform_1, window_bounds = array<i64: 1, 32, 1>}, {transform_indices = @transform_2, window_bounds = array<i64: 128, 128>}, {transform_indices = @transform_3, window_bounds = array<i64: 32, 128>}, {transform_indices = @transform_4, window_bounds = array<i64: 1, 128, 128>}, {pipeline_mode = #tpu.pipeline_mode<synchronous>, transform_indices = @transform_5, window_bounds = array<i64: 128, 128>}, {pipeline_mode = #tpu.pipeline_mode<synchronous>, transform_indices = @transform_6, window_bounds = array<i64: 1, 128>}, {transform_indices = @transform_7, window_bounds = array<i64: 32, 128>}]} {
    %c0_i32 = arith.constant 0 : i32
    %0 = arith.cmpi eq, %arg1, %c0_i32 : i32
    %c0_i32_0 = arith.constant 0 : i32
    %1 = arith.cmpi eq, %arg2, %c0_i32_0 : i32
    %2 = arith.andi %0, %1 : i1
    %3 = arith.extui %2 : i1 to i32
    %c0_i32_1 = arith.constant 0 : i32
    %4 = arith.cmpi ne, %3, %c0_i32_1 : i32
    scf.if %4 {
      %c0 = arith.constant 0 : index
      %c0_6 = arith.constant 0 : index
      %19 = vector.load %arg10[%c0, %c0_6] : memref<32x128xbf16, #tpu.memory_space<vmem>>, vector<32x128xbf16>
      %c0_7 = arith.constant 0 : index
      %c0_8 = arith.constant 0 : index
      %20 = vector.load %arg12[%c0_7, %c0_8] : memref<128x128xbf16, #tpu.memory_space<vmem>>, vector<128x128xbf16>
      %cst = arith.constant dense<0.000000e+00> : vector<32x128xf32>
      %21 = tpu.matmul %19, %20, %cst {dimension_numbers = #tpu.dot_dimension_numbers<[1], [0], [0], [1], [0, 0, 1, 1], [], []>} : vector<32x128xbf16>, vector<128x128xbf16>, vector<32x128xf32> -> vector<32x128xf32>
      %c0_9 = arith.constant 0 : index
      %c0_10 = arith.constant 0 : index
      %22 = vector.load %arg13[%c0_9, %c0_10] : memref<1x128xf32, #tpu.memory_space<vmem>>, vector<1x128xf32>
      %23 = vector.broadcast %22 : vector<1x128xf32> to vector<32x128xf32>
      %24 = arith.addf %21, %23 : vector<32x128xf32>
      %c0_11 = arith.constant 0 : index
      %c0_12 = arith.constant 0 : index
      %25 = vector.load %arg14[%c0_11, %c0_12] : memref<32x128xf32, #tpu.memory_space<vmem>>, vector<32x128xf32>
      tpu.vector_store %arg14[%c0_11, %c0_12], %24 {strides = array<i32>} : memref<32x128xf32, #tpu.memory_space<vmem>>, vector<32x128xf32>,
    } else {
    }
    %c1_i32 = arith.constant 1 : i32
    %5 = arith.muli %arg0, %c1_i32 : i32
    %6 = arith.addi %5, %arg1 : i32
    %c3_i32 = arith.constant 3 : i32
    %7 = arith.muli %6, %c3_i32 : i32
    %8 = arith.addi %7, %arg2 : i32
    %9 = arith.index_cast %8 : i32 to index
    %10 = memref.load %arg3[%9] : memref<12xi32, #tpu.memory_space<smem>>
    %c0_i32_2 = arith.constant 0 : i32
    %11 = arith.cmpi ne, %10, %c0_i32_2 : i32
    %12 = arith.extui %11 : i1 to i32
    %c0_i32_3 = arith.constant 0 : i32
    %13 = arith.cmpi ne, %12, %c0_i32_3 : i32
    scf.if %13 {
      %c0 = arith.constant 0 : index
      %c0_6 = arith.constant 0 : index
      %c0_7 = arith.constant 0 : index
      %19 = vector.load %arg7[%c0, %c0_6, %c0_7] : memref<1x32x128xi8, #tpu.memory_space<vmem>>, vector<1x32x128xi8>
      %20 = vector.shape_cast %19 : vector<1x32x128xi8> to vector<32x128xi8>
      %21 = arith.sitofp %20 : vector<32x128xi8> to vector<32x128xbf16>
      %c0_8 = arith.constant 0 : index
      %c0_9 = arith.constant 0 : index
      %22 = vector.load %arg9[%c0_8, %c0_9] : memref<128x128xbf16, #tpu.memory_space<vmem>>, vector<128x128xbf16>
      %cst = arith.constant dense<0.000000e+00> : vector<32x128xf32>
      %23 = tpu.matmul %21, %22, %cst {dimension_numbers = #tpu.dot_dimension_numbers<[1], [0], [0], [1], [0, 0, 1, 1], [], []>} : vector<32x128xbf16>, vector<128x128xbf16>, vector<32x128xf32> -> vector<32x128xf32>
      %c0_10 = arith.constant 0 : index
      %c0_11 = arith.constant 0 : index
      %24 = vector.load %arg14[%c0_10, %c0_11] : memref<32x128xf32, #tpu.memory_space<vmem>>, vector<32x128xf32>
      %25 = arith.truncf %23 : vector<32x128xf32> to vector<32x128xbf16>
      %c0_12 = arith.constant 0 : index
      %c0_13 = arith.constant 0 : index
      %c0_14 = arith.constant 0 : index
      %26 = vector.load %arg11[%c0_12, %c0_13, %c0_14] : memref<1x128x128xbf16, #tpu.memory_space<vmem>>, vector<1x128x128xbf16>
      %27 = vector.shape_cast %26 : vector<1x128x128xbf16> to vector<128x128xbf16>
      %cst_15 = arith.constant dense<0.000000e+00> : vector<32x128xf32>
      %28 = tpu.matmul %25, %27, %cst_15 {dimension_numbers = #tpu.dot_dimension_numbers<[1], [0], [0], [1], [0, 0, 1, 1], [], []>} : vector<32x128xbf16>, vector<128x128xbf16>, vector<32x128xf32> -> vector<32x128xf32>
      %c0_16 = arith.constant 0 : index
      %c0_17 = arith.constant 0 : index
      %c0_18 = arith.constant 0 : index
      %29 = vector.load %arg8[%c0_16, %c0_17, %c0_18] : memref<1x32x1xf32, #tpu.memory_space<vmem>>, vector<1x32x1xf32>
      %30 = vector.shape_cast %29 : vector<1x32x1xf32> to vector<32x1xf32>
      %31 = vector.broadcast %30 : vector<32x1xf32> to vector<32x128xf32>
      %32 = arith.mulf %28, %31 : vector<32x128xf32>
      %33 = arith.addf %24, %32 : vector<32x128xf32>
      %c0_19 = arith.constant 0 : index
      %c0_20 = arith.constant 0 : index
      %34 = vector.load %arg14[%c0_19, %c0_20] : memref<32x128xf32, #tpu.memory_space<vmem>>, vector<32x128xf32>
      tpu.vector_store %arg14[%c0_19, %c0_20], %33 {strides = array<i32>} : memref<32x128xf32, #tpu.memory_space<vmem>>, vector<32x128xf32>,
    } else {
    }
    %c0_i32_4 = arith.constant 0 : i32
    %14 = arith.cmpi eq, %arg1, %c0_i32_4 : i32
    %c2_i32 = arith.constant 2 : i32
    %15 = arith.cmpi eq, %arg2, %c2_i32 : i32
    %16 = arith.andi %14, %15 : i1
    %17 = arith.extui %16 : i1 to i32
    %c0_i32_5 = arith.constant 0 : i32
    %18 = arith.cmpi ne, %17, %c0_i32_5 : i32
    scf.if %18 {
      %c0 = arith.constant 0 : index
      %c0_6 = arith.constant 0 : index
      %19 = vector.load %arg14[%c0, %c0_6] : memref<32x128xf32, #tpu.memory_space<vmem>>, vector<32x128xf32>
      %cst = arith.constant 0.000000e+00 : f32
      %20 = vector.broadcast %cst : f32 to vector<32x128xf32>
      %21 = arith.maximumf %19, %20 : vector<32x128xf32>
      %c0_7 = arith.constant 0 : index
      %c0_8 = arith.constant 0 : index
      %22 = vector.load %arg14[%c0_7, %c0_8] : memref<32x128xf32, #tpu.memory_space<vmem>>, vector<32x128xf32>
      tpu.vector_store %arg14[%c0_7, %c0_8], %21 {strides = array<i32>} : memref<32x128xf32, #tpu.memory_space<vmem>>, vector<32x128xf32>,
    } else {
    }
    return
  }
  func.func @transform_0(%arg0: i32, %arg1: i32, %arg2: i32, %arg3: memref<12xi32, #tpu.memory_space<smem>>, %arg4: memref<12xi32, #tpu.memory_space<smem>>, %arg5: memref<12xi32, #tpu.memory_space<smem>>, %arg6: memref<12xi32, #tpu.memory_space<smem>>) -> (i32, i32, i32) {
    %c1_i32 = arith.constant 1 : i32
    %0 = arith.muli %arg0, %c1_i32 : i32
    %1 = arith.addi %0, %arg1 : i32
    %c3_i32 = arith.constant 3 : i32
    %2 = arith.muli %1, %c3_i32 : i32
    %3 = arith.addi %2, %arg2 : i32
    %4 = arith.index_cast %3 : i32 to index
    %5 = memref.load %arg4[%4] : memref<12xi32, #tpu.memory_space<smem>>
    %6 = arith.index_cast %3 : i32 to index
    %7 = memref.load %arg5[%6] : memref<12xi32, #tpu.memory_space<smem>>
    %8 = arith.index_cast %3 : i32 to index
    %9 = memref.load %arg6[%8] : memref<12xi32, #tpu.memory_space<smem>>
    %c0_i32 = arith.constant 0 : i32
    return %5, %7, %9 : i32, i32, i32
  }
  func.func @transform_1(%arg0: i32, %arg1: i32, %arg2: i32, %arg3: memref<12xi32, #tpu.memory_space<smem>>, %arg4: memref<12xi32, #tpu.memory_space<smem>>, %arg5: memref<12xi32, #tpu.memory_space<smem>>, %arg6: memref<12xi32, #tpu.memory_space<smem>>) -> (i32, i32, i32) {
    %c0_i32 = arith.constant 0 : i32
    %c0_i32_0 = arith.constant 0 : i32
    return %arg2, %arg0, %c0_i32 : i32, i32, i32
  }
  func.func @transform_2(%arg0: i32, %arg1: i32, %arg2: i32, %arg3: memref<12xi32, #tpu.memory_space<smem>>, %arg4: memref<12xi32, #tpu.memory_space<smem>>, %arg5: memref<12xi32, #tpu.memory_space<smem>>, %arg6: memref<12xi32, #tpu.memory_space<smem>>) -> (i32, i32) {
    %c0_i32 = arith.constant 0 : i32
    %c0_i32_0 = arith.constant 0 : i32
    return %arg1, %c0_i32 : i32, i32
  }
  func.func @transform_3(%arg0: i32, %arg1: i32, %arg2: i32, %arg3: memref<12xi32, #tpu.memory_space<smem>>, %arg4: memref<12xi32, #tpu.memory_space<smem>>, %arg5: memref<12xi32, #tpu.memory_space<smem>>, %arg6: memref<12xi32, #tpu.memory_space<smem>>) -> (i32, i32) {
    %c0_i32 = arith.constant 0 : i32
    %c0_i32_0 = arith.constant 0 : i32
    return %arg0, %c0_i32 : i32, i32
  }
  func.func @transform_4(%arg0: i32, %arg1: i32, %arg2: i32, %arg3: memref<12xi32, #tpu.memory_space<smem>>, %arg4: memref<12xi32, #tpu.memory_space<smem>>, %arg5: memref<12xi32, #tpu.memory_space<smem>>, %arg6: memref<12xi32, #tpu.memory_space<smem>>) -> (i32, i32, i32) {
    %c0_i32 = arith.constant 0 : i32
    %c0_i32_0 = arith.constant 0 : i32
    %c0_i32_1 = arith.constant 0 : i32
    return %arg2, %c0_i32, %c0_i32_0 : i32, i32, i32
  }
  func.func @transform_5(%arg0: i32, %arg1: i32, %arg2: i32, %arg3: memref<12xi32, #tpu.memory_space<smem>>, %arg4: memref<12xi32, #tpu.memory_space<smem>>, %arg5: memref<12xi32, #tpu.memory_space<smem>>, %arg6: memref<12xi32, #tpu.memory_space<smem>>) -> (i32, i32) {
    %c0_i32 = arith.constant 0 : i32
    %c0_i32_0 = arith.constant 0 : i32
    %c0_i32_1 = arith.constant 0 : i32
    return %c0_i32, %c0_i32_0 : i32, i32
  }
  func.func @transform_6(%arg0: i32, %arg1: i32, %arg2: i32, %arg3: memref<12xi32, #tpu.memory_space<smem>>, %arg4: memref<12xi32, #tpu.memory_space<smem>>, %arg5: memref<12xi32, #tpu.memory_space<smem>>, %arg6: memref<12xi32, #tpu.memory_space<smem>>) -> (i32, i32) {
    %c0_i32 = arith.constant 0 : i32
    %c0_i32_0 = arith.constant 0 : i32
    %c0_i32_1 = arith.constant 0 : i32
    return %c0_i32, %c0_i32_0 : i32, i32
  }
  func.func @transform_7(%arg0: i32, %arg1: i32, %arg2: i32, %arg3: memref<12xi32, #tpu.memory_space<smem>>, %arg4: memref<12xi32, #tpu.memory_space<smem>>, %arg5: memref<12xi32, #tpu.memory_space<smem>>, %arg6: memref<12xi32, #tpu.memory_space<smem>>) -> (i32, i32) {
    %c0_i32 = arith.constant 0 : i32
    %c0_i32_0 = arith.constant 0 : i32
    return %arg0, %c0_i32 : i32, i32
  }
}

</mosaic_0001>

<llo_original>
// kernel: tpu_custom_call.1
$region0: #{tpu_custom_call.1}
  #allocation0 [shape = 'u32[]', space=smem, size = 0x4, offset = 0x4, fixed_abs, tag = 'smem constant byte address 0x4 - core index']
  #allocation1 [shape = 'u32[144,128]{1,0:T(1,128)}', space=vmem, size = 0x12000, scoped, tag = 'internal scratch']
  #allocation2 [shape = 's32[1]{0}', space=sflag, size = 0x4, scoped, tag = 'scoped memory for tpu_custom_call.1']
  #allocation3 [shape = 'u8[512]{0}', space=smem, size = 0x200, scoped, tag = 'prefetched SMEM operand 0']
  #allocation4 [shape = 'u8[512]{0}', space=smem, size = 0x200, scoped, tag = 'prefetched SMEM operand 1']
  #allocation5 [shape = 'u8[512]{0}', space=smem, size = 0x200, scoped, tag = 'prefetched SMEM operand 2']
  #allocation6 [shape = 'u8[512]{0}', space=smem, size = 0x200, scoped, tag = 'prefetched SMEM operand 3']
  %s0 = inlined_call_operand.vmem [shape: s32[12], index: 0, kind: input, shape index: {}]
  %s1 = inlined_call_operand.vmem [shape: s32[12], index: 1, kind: input, shape index: {}]
  %s2 = inlined_call_operand.vmem [shape: s32[12], index: 2, kind: input, shape index: {}]
  %s3 = inlined_call_operand.vmem [shape: s32[12], index: 3, kind: input, shape index: {}]
  %s4 = inlined_call_operand.vmem [shape: s8[3,128,128], index: 4, kind: input, shape index: {}]
  %s5 = inlined_call_operand.vmem [shape: f32[3,128,1], index: 5, kind: input, shape index: {}]
  %s6 = inlined_call_operand.vmem [shape: bf16[128,128], index: 6, kind: input, shape index: {}]
  %s7 = inlined_call_operand.hbm [shape: bf16[128,128], index: 7, kind: input, shape index: {}]
  %s8 = inlined_call_operand.vmem [shape: bf16[3,128,128], index: 8, kind: input, shape index: {}]
  %s9 = inlined_call_operand.hbm [shape: bf16[128,128], index: 9, kind: input, shape index: {}]
  %s10 = inlined_call_operand.vmem [shape: f32[1,128], index: 10, kind: input, shape index: {}]
  %s11 = inlined_call_operand.hbm [shape: f32[128,128], index: 11, kind: output, shape index: {}]
  %s12 = sld [smem:[#allocation0]]
  $region81: #{tpu_custom_call.1} parent=0
    _
  %s14 = ssub.s32 1, %s12
  %s15 = scalar_select 0, %s14, %s12
  %s16 = sshll.u32 %s0, 4
  %s17 = int_to_ptr.vmem [resolvable:$true] %s16
  %19 = dma.vmem_to_smem %s17, 16, [#allocation3], [#allocation2]
  %s20 = sshll.u32 %s1, 4
  %s21 = int_to_ptr.vmem [resolvable:$true] %s20
  %23 = dma.vmem_to_smem %s21, 16, [#allocation4], [#allocation2]
  %s24 = sshll.u32 %s2, 4
  %s25 = int_to_ptr.vmem [resolvable:$true] %s24
  %27 = dma.vmem_to_smem %s25, 16, [#allocation5], [#allocation2]
  %s28 = sshll.u32 %s3, 4
  %s29 = int_to_ptr.vmem [resolvable:$true] %s28
  %31 = dma.vmem_to_smem %s29, 16, [#allocation6], [#allocation2]
  %32 = dma.done [#allocation2], 64
  %33 = sfence
  $region1: #{tpu_custom_call.1} parent=0
    #allocation7 [shape = 'u8[16384]{0}', space=vmem, size = 0x4000, scoped, tag = 'input window, operand 7']
    #allocation8 [shape = 's32[2]{0}', space=sflag, size = 0x8, scoped, tag = 'scoped memory for tpu_custom_call.1']
    #allocation9 [shape = 's32[2]{0}', space=sflag, size = 0x8, scoped, tag = 'scoped memory for tpu_custom_call.1']
    #allocation10 [shape = 'u8[32768]{0}', space=vmem, size = 0x8000, scoped, tag = 'input window, operand 9, single buffered']
    #allocation11 [shape = 's32[1]{0}', space=sflag, size = 0x4, scoped, tag = 'scoped memory for tpu_custom_call.1']
    #allocation12 [shape = 'u8[32768]{0}', space=vmem, size = 0x8000, scoped, tag = 'output window, operand 0']
    %34 = vsyncpa [#allocation8], 0
    %s35 = scalar_lea.sflag [#allocation8], 1
    %36 = vsyncpa %s35, 0
    %37 = vsyncpa [#allocation11], 0
    %38 = vsyncpa [#allocation9], 0
    %s39 = scalar_lea.sflag [#allocation9], 1
    %40 = vsyncpa %s39, 0
    loop: start=0, step=1, limit=14
    $region2: #{tpu_custom_call.1} parent=1 // loop_pre_header
      _
    $region3: #{tpu_custom_call.1} parent=1 // loop_header
      %s42 = sphi 0, %s46
      %p43 = scmp.ge.s32.totalorder %s42, 14
      %s49 = sphi 0, %s68
      %s50 = sphi 0, %s64
      %s51 = sphi 0, %s60
      %s52 = sphi 0, %s49
      %s53 = sphi 0, %s50
      %s54 = sphi 0, %s51
      %s55 = sphi 0, %s52
      %s56 = sphi 0, %s53
      %s57 = sphi 0, %s54
      %s87 = sphi 0, %s89
      %s90 = sphi 0, %s87
      %s91 = sphi 0, %s90
      %s107 = sphi 0, %s91
      %s115 = sphi 0, %s117
      %s118 = sphi 0, %s115
      %s119 = sphi 0, %s118
      %s135 = sphi 0, %s119
      %s141 = sphi 0, %s143
      %s144 = sphi 0, %s141
      %s145 = sphi 0, %s144
      %s161 = sphi 0, %s145
      %s167 = sphi 0, %s169
      %s170 = sphi 0, %s167
      %s171 = sphi 0, %s170
      %s187 = sphi 0, %s171
      %s193 = sphi 0, %s195
      %s196 = sphi 0, %s193
      %s197 = sphi 0, %s196
      %s213 = sphi 0, %s197
      %s217 = sphi 0, %s217
      %s219 = sphi 0, %s217
      %s220 = sphi 0, %s219
      %s234 = sphi 0, %s220
      %s238 = sphi 0, %s238
      %s240 = sphi 0, %s238
      %s241 = sphi 0, %s240
      %s255 = sphi 0, %s241
      %s261 = sphi 0, %s263
      %s264 = sphi 0, %s261
      %s265 = sphi 0, %s264
      %s281 = sphi 0, %s265
    $region4: #{tpu_custom_call.1} parent=1 // loop_header_branch
      %45 = sbr.rel (%p43) target = $region8
    $region5: #{tpu_custom_call.1} parent=1 // loop_body
      %s47 = ssub.s32 %s42, 1
      %s48 = ssub.s32 %s42, 2
      %s58 = sadd.s32 1, %s51
      %p59 = scmp.ge.s32.totalorder %s58, 3
      %s60 = scalar_select %p59, 0, %s58
      %s61 = sadd.s32 1, %s50
      %s62 = scalar_select %p59, %s61, %s50
      %p63 = scmp.ge.s32.totalorder %s62, 1
      %s64 = scalar_select %p63, 0, %s62
      %s65 = sadd.s32 1, %s49
      %s66 = scalar_select %p63, %s65, %s49
      %p67 = scmp.ge.s32.totalorder %s66, 4
      %s68 = scalar_select %p67, 0, %s66
      %s69 = sadd.s32 %s49, %s50
      %s70 = smul.u32 %s69, 3
      %s71 = sadd.s32 %s70, %s51
      %s72 = sld [smem:[#allocation4 + %s71]]
      %s73 = sld [smem:[#allocation5 + %s71]]
      %s74 = sld [smem:[#allocation6 + %s71]]
      %s75 = sadd.s32 %s68, %s64
      %s76 = smul.u32 %s75, 3
      %s77 = sadd.s32 %s76, %s60
      %s78 = sld [smem:[#allocation4 + %s77]]
      %s79 = sld [smem:[#allocation5 + %s77]]
      %s80 = sld [smem:[#allocation6 + %s77]]
      %s81 = ssub.s32 %s72, %s78
      %s82 = ssub.s32 %s73, %s79
      %s83 = sor.u32 %s81, %s82
      %s84 = ssub.s32 %s74, %s80
      %s85 = sor.u32 %s83, %s84
      %p86 = scmp.eq.s32.totalorder %s85, 0
      %s88 = sadd.s32 %s87, 1
      %s89 = scalar_select %p86, %s87, %s88
      %p92 = pneg %p86
      %p93 = scmp.eq.s32.totalorder %s42, 11
      %p94 = por %p92, %p93
      %p95 = scmp.ne.s32.totalorder %s87, %s90
      %p96 = scmp.eq.s32.totalorder %s42, 0
      %p97 = por %p95, %p96
      %p98 = scmp.ne.s32.totalorder %s87, %s90
      %p99 = scmp.eq.s32.totalorder %s47, 11
      %p100 = por %p98, %p99
      %p101 = scmp.ne.s32.totalorder %s90, %s91
      %p102 = scmp.eq.s32.totalorder %s47, 0
      %p103 = por %p101, %p102
      %p104 = scmp.ne.s32.totalorder %s90, %s91
      %p105 = scmp.eq.s32.totalorder %s48, 11
      %p106 = por %p104, %p105
      %p108 = scmp.ne.s32.totalorder %s91, %s107
      %p109 = scmp.eq.s32.totalorder %s48, 0
      %p110 = por %p108, %p109
      %s111 = ssub.s32 %s51, %s60
      %s112 = ssub.s32 %s49, %s68
      %s113 = sor.u32 %s111, %s112
      %p114 = scmp.eq.s32.totalorder %s113, 0
      %s116 = sadd.s32 %s115, 1
      %s117 = scalar_select %p114, %s115, %s116
      %p120 = pneg %p114
      %p121 = scmp.eq.s32.totalorder %s42, 11
      %p122 = por %p120, %p121
      %p123 = scmp.ne.s32.totalorder %s115, %s118
      %p124 = scmp.eq.s32.totalorder %s42, 0
      %p125 = por %p123, %p124
      %p126 = scmp.ne.s32.totalorder %s115, %s118
      %p127 = scmp.eq.s32.totalorder %s47, 11
      %p128 = por %p126, %p127
      %p129 = scmp.ne.s32.totalorder %s118, %s119
      %p130 = scmp.eq.s32.totalorder %s47, 0
      %p131 = por %p129, %p130
      %p132 = scmp.ne.s32.totalorder %s118, %s119
      %p133 = scmp.eq.s32.totalorder %s48, 11
      %p134 = por %p132, %p133
      %p136 = scmp.ne.s32.totalorder %s119, %s135
      %p137 = scmp.eq.s32.totalorder %s48, 0
      %p138 = por %p136, %p137
      %s139 = ssub.s32 %s50, %s64
      %p140 = scmp.eq.s32.totalorder %s139, 0
      %s142 = sadd.s32 %s141, 1
      %s143 = scalar_select %p140, %s141, %s142
      %p146 = pneg %p140
      %p147 = scmp.eq.s32.totalorder %s42, 11
      %p148 = por %p146, %p147
      %p149 = scmp.ne.s32.totalorder %s141, %s144
      %p150 = scmp.eq.s32.totalorder %s42, 0
      %p151 = por %p149, %p150
      %p152 = scmp.ne.s32.totalorder %s141, %s144
      %p153 = scmp.eq.s32.totalorder %s47, 11
      %p154 = por %p152, %p153
      %p155 = scmp.ne.s32.totalorder %s144, %s145
      %p156 = scmp.eq.s32.totalorder %s47, 0
      %p157 = por %p155, %p156
      %p158 = scmp.ne.s32.totalorder %s144, %s145
      %p159 = scmp.eq.s32.totalorder %s48, 11
      %p160 = por %p158, %p159
      %p162 = scmp.ne.s32.totalorder %s145, %s161
      %p163 = scmp.eq.s32.totalorder %s48, 0
      %p164 = por %p162, %p163
      %s165 = ssub.s32 %s49, %s68
      %p166 = scmp.eq.s32.totalorder %s165, 0
      %s168 = sadd.s32 %s167, 1
      %s169 = scalar_select %p166, %s167, %s168
      %p172 = pneg %p166
      %p173 = scmp.eq.s32.totalorder %s42, 11
      %p174 = por %p172, %p173
      %p175 = scmp.ne.s32.totalorder %s167, %s170
      %p176 = scmp.eq.s32.totalorder %s42, 0
      %p177 = por %p175, %p176
      %p178 = scmp.ne.s32.totalorder %s167, %s170
      %p179 = scmp.eq.s32.totalorder %s47, 11
      %p180 = por %p178, %p179
      %p181 = scmp.ne.s32.totalorder %s170, %s171
      %p182 = scmp.eq.s32.totalorder %s47, 0
      %p183 = por %p181, %p182
      %p184 = scmp.ne.s32.totalorder %s170, %s171
      %p185 = scmp.eq.s32.totalorder %s48, 11
      %p186 = por %p184, %p185
      %p188 = scmp.ne.s32.totalorder %s171, %s187
      %p189 = scmp.eq.s32.totalorder %s48, 0
      %p190 = por %p188, %p189
      %s191 = ssub.s32 %s51, %s60
      %p192 = scmp.eq.s32.totalorder %s191, 0
      %s194 = sadd.s32 %s193, 1
      %s195 = scalar_select %p192, %s193, %s194
      %p198 = pneg %p192
      %p199 = scmp.eq.s32.totalorder %s42, 11
      %p200 = por %p198, %p199
      %p201 = scmp.ne.s32.totalorder %s193, %s196
      %p202 = scmp.eq.s32.totalorder %s42, 0
      %p203 = por %p201, %p202
      %p204 = scmp.ne.s32.totalorder %s193, %s196
      %p205 = scmp.eq.s32.totalorder %s47, 11
      %p206 = por %p204, %p205
      %p207 = scmp.ne.s32.totalorder %s196, %s197
      %p208 = scmp.eq.s32.totalorder %s47, 0
      %p209 = por %p207, %p208
      %p210 = scmp.ne.s32.totalorder %s196, %s197
      %p211 = scmp.eq.s32.totalorder %s48, 11
      %p212 = por %p210, %p211
      %p214 = scmp.ne.s32.totalorder %s197, %s213
      %p215 = scmp.eq.s32.totalorder %s48, 0
      %p216 = por %p214, %p215
      %s218 = sadd.s32 %s217, 1
      %p221 = scmp.eq.s32.totalorder %s42, 11
      %p222 = scmp.ne.s32.totalorder %s217, %s219
      %p223 = scmp.eq.s32.totalorder %s42, 0
      %p224 = por %p222, %p223
      %p225 = scmp.ne.s32.totalorder %s217, %s219
      %p226 = scmp.eq.s32.totalorder %s47, 11
      %p227 = por %p225, %p226
      %p228 = scmp.ne.s32.totalorder %s219, %s220
      %p229 = scmp.eq.s32.totalorder %s47, 0
      %p230 = por %p228, %p229
      %p231 = scmp.ne.s32.totalorder %s219, %s220
      %p232 = scmp.eq.s32.totalorder %s48, 11
      %p233 = por %p231, %p232
      %p235 = scmp.ne.s32.totalorder %s220, %s234
      %p236 = scmp.eq.s32.totalorder %s48, 0
      %p237 = por %p235, %p236
      %s239 = sadd.s32 %s238, 1
      %p242 = scmp.eq.s32.totalorder %s42, 11
      %p243 = scmp.ne.s32.totalorder %s238, %s240
      %p244 = scmp.eq.s32.totalorder %s42, 0
      %p245 = por %p243, %p244
      %p246 = scmp.ne.s32.totalorder %s238, %s240
      %p247 = scmp.eq.s32.totalorder %s47, 11
      %p248 = por %p246, %p247
      %p249 = scmp.ne.s32.totalorder %s240, %s241
      %p250 = scmp.eq.s32.totalorder %s47, 0
      %p251 = por %p249, %p250
      %p252 = scmp.ne.s32.totalorder %s240, %s241
      %p253 = scmp.eq.s32.totalorder %s48, 11
      %p254 = por %p252, %p253
      %p256 = scmp.ne.s32.totalorder %s241, %s255
      %p257 = scmp.eq.s32.totalorder %s48, 0
      %p258 = por %p256, %p257
      %s259 = ssub.s32 %s49, %s68
      %p260 = scmp.eq.s32.totalorder %s259, 0
      %s262 = sadd.s32 %s261, 1
      %s263 = scalar_select %p260, %s261, %s262
      %p266 = pneg %p260
      %p267 = scmp.eq.s32.totalorder %s42, 11
      %p268 = por %p266, %p267
      %p269 = scmp.ne.s32.totalorder %s261, %s264
      %p270 = scmp.eq.s32.totalorder %s42, 0
      %p271 = por %p269, %p270
      %p272 = scmp.ne.s32.totalorder %s261, %s264
      %p273 = scmp.eq.s32.totalorder %s47, 11
      %p274 = por %p272, %p273
      %p275 = scmp.ne.s32.totalorder %s264, %s265
      %p276 = scmp.eq.s32.totalorder %s47, 0
      %p277 = por %p275, %p276
      %p278 = scmp.ne.s32.totalorder %s264, %s265
      %p279 = scmp.eq.s32.totalorder %s48, 11
      %p280 = por %p278, %p279
      %p282 = scmp.ne.s32.totalorder %s265, %s281
      %p283 = scmp.eq.s32.totalorder %s48, 0
      %p284 = por %p282, %p283
      %p285 = scmp.le.s32.totalorder 1, %s42
      %p286 = scmp.lt.s32.totalorder %s42, 13
      %p287 = pnand %p285, %p286
      %p288 = pneg %p287
      // Predicated region
      $region9: #{tpu_custom_call.1} parent=5 // pred_check
        _
      $region10: #{tpu_custom_call.1} parent=5 // pred_check_branch
        %290 = sbr.rel (%p287) target = $region12
      $region11: #{tpu_custom_call.1} parent=5 // pred_region
        %s291 = ssub.s32 %s42, 1
        // Predicated region
        $region13: #{tpu_custom_call.1} parent=11 // pred_check
          %p292 = pneg %p157
        $region14: #{tpu_custom_call.1} parent=11 // pred_check_branch
          %294 = sbr.rel (%p292) target = $region16
        $region15: #{tpu_custom_call.1} parent=11 // pred_region
          %s295 = smul.u32 16, %s53
          %p296 = scmp.lt.s32.totalorder %s295, 15
          %s297 = scalar_select %p296, %s295, 15
          %s298 = smul.addr %s297, 4
          %s299 = scalar_lea.vmem %s6, %s298
          %s300 = smul.u32 16, %s53
        $region16: #{tpu_custom_call.1} parent=11 // pred_fallthru
          _
        // Predicated region
        $region17: #{tpu_custom_call.1} parent=11 // pred_check
          %p301 = pneg %p230
        $region18: #{tpu_custom_call.1} parent=11 // pred_check_branch
          %303 = sbr.rel (%p301) target = $region20
        $region19: #{tpu_custom_call.1} parent=11 // pred_region
          %s305 = ssub.s32 1024, 1024
          %306 = vsyncadd [#allocation11], %s305
          %s307 = sshll.u32 [#allocation10], 4
          %s308 = int_to_ptr.vmem [resolvable:$true] %s307
          %313 = dma.hbm_to_vmem [thread:$0]  %s9, 1024, %s308, [#allocation11], 64, 64, 4
        $region20: #{tpu_custom_call.1} parent=11 // pred_fallthru
          _
        // Predicated region
        $region21: #{tpu_custom_call.1} parent=11 // pred_check
          %p314 = pneg %p251
        $region22: #{tpu_custom_call.1} parent=11 // pred_check_branch
          %316 = sbr.rel (%p314) target = $region24
        $region23: #{tpu_custom_call.1} parent=11 // pred_region
          _
        $region24: #{tpu_custom_call.1} parent=11 // pred_fallthru
          _
      $region12: #{tpu_custom_call.1} parent=5 // pred_fallthru
        _
      %p317 = scmp.lt.s32.totalorder %s42, 12
      // Predicated region
      $region25: #{tpu_custom_call.1} parent=5 // pred_check
        %p318 = pneg %p317
      $region26: #{tpu_custom_call.1} parent=5 // pred_check_branch
        %320 = sbr.rel (%p318) target = $region28
      $region27: #{tpu_custom_call.1} parent=5 // pred_region
        // Predicated region
        $region29: #{tpu_custom_call.1} parent=27 // pred_check
          %p321 = pneg %p97
        $region30: #{tpu_custom_call.1} parent=27 // pred_check_branch
          %323 = sbr.rel (%p321) target = $region32
        $region31: #{tpu_custom_call.1} parent=27 // pred_region
          %s324 = sadd.s32 %s49, %s50
          %s325 = smul.u32 %s324, 3
          %s326 = sadd.s32 %s325, %s51
          %s327 = sld [smem:[#allocation4 + %s326]]
          %s328 = sld [smem:[#allocation5 + %s326]]
          %s329 = sld [smem:[#allocation6 + %s326]]
          %p330 = scmp.lt.s32.totalorder %s327, 2
          %s331 = scalar_select %p330, %s327, 2
          %p332 = scmp.lt.s32.totalorder %s328, 3
          %s333 = scalar_select %p332, %s328, 3
          %p334 = scmp.lt.s32.totalorder %s329, 0
          %s335 = scalar_select %p334, %s329, 0
          %s336 = sadd.s32 %s335, %s333
          %s337 = smul.addr %s331, 4
          %s338 = sadd.s32 %s336, %s337
          %s339 = smul.addr %s338, 8
          %s340 = scalar_lea.vmem %s4, %s339
          %s341 = sadd.s32 %s49, %s50
          %s342 = smul.u32 %s341, 3
          %s343 = sadd.s32 %s342, %s51
          %s344 = sld [smem:[#allocation4 + %s343]]
          %s345 = sld [smem:[#allocation5 + %s343]]
          %s346 = sld [smem:[#allocation6 + %s343]]
        $region32: #{tpu_custom_call.1} parent=27 // pred_fallthru
          _
        // Predicated region
        $region33: #{tpu_custom_call.1} parent=27 // pred_check
          %p347 = pneg %p125
        $region34: #{tpu_custom_call.1} parent=27 // pred_check_branch
          %349 = sbr.rel (%p347) target = $region36
        $region35: #{tpu_custom_call.1} parent=27 // pred_region
          %s350 = smul.u32 4, %s49
          %p351 = scmp.lt.s32.totalorder %s51, 2
          %s352 = scalar_select %p351, %s51, 2
          %p353 = scmp.lt.s32.totalorder %s350, 15
          %s354 = scalar_select %p353, %s350, 15
          %s355 = smul.addr %s352, 16
          %s356 = sadd.s32 %s354, %s355
          %s357 = smul.addr %s356, 8
          %s358 = scalar_lea.vmem %s5, %s357
          %s359 = smul.u32 4, %s49
        $region36: #{tpu_custom_call.1} parent=27 // pred_fallthru
          _
        // Predicated region
        $region37: #{tpu_custom_call.1} parent=27 // pred_check
          %p360 = pneg %p177
        $region38: #{tpu_custom_call.1} parent=27 // pred_check_branch
          %362 = sbr.rel (%p360) target = $region40
        $region39: #{tpu_custom_call.1} parent=27 // pred_region
          %s363 = sand.u32 %s167, 1
          %s364 = scalar_lea.sflag [#allocation8], %s363
          %s365 = sand.u32 %s167, 1
          %s366 = smul.addr %s365, 16
          %s367 = scalar_lea.vmem [#allocation7], %s366
          %s368 = smul.u32 4, %s49
          %s370 = ssub.s32 256, 256
          %371 = vsyncadd %s364, %s370
          %s372 = smul.addr %s368, 64
          %s373 = scalar_lea.hbm %s7, %s372
          %s374 = sshll.u32 %s367, 4
          %s375 = int_to_ptr.vmem [resolvable:$true] %s374
          %380 = dma.hbm_to_vmem [thread:$0]  %s373, 256, %s375, %s364, 64, 64, 4
        $region40: #{tpu_custom_call.1} parent=27 // pred_fallthru
          _
        // Predicated region
        $region41: #{tpu_custom_call.1} parent=27 // pred_check
          %p381 = pneg %p203
        $region42: #{tpu_custom_call.1} parent=27 // pred_check_branch
          %383 = sbr.rel (%p381) target = $region44
        $region43: #{tpu_custom_call.1} parent=27 // pred_region
          %p384 = scmp.lt.s32.totalorder %s51, 2
          %s385 = scalar_select %p384, %s51, 2
          %s386 = smul.addr %s385, 16
          %s387 = smul.addr %s386, 4
          %s388 = scalar_lea.vmem %s8, %s387
        $region44: #{tpu_custom_call.1} parent=27 // pred_fallthru
          _
      $region28: #{tpu_custom_call.1} parent=5 // pred_fallthru
        _
      %p389 = scmp.le.s32.totalorder 1, %s42
      %p390 = scmp.lt.s32.totalorder %s42, 13
      %p391 = pnand %p389, %p390
      %p392 = pneg %p391
      // Predicated region
      $region45: #{tpu_custom_call.1} parent=5 // pred_check
        _
      $region46: #{tpu_custom_call.1} parent=5 // pred_check_branch
        %394 = sbr.rel (%p391) target = $region48
      $region47: #{tpu_custom_call.1} parent=5 // pred_region
        %s395 = ssub.s32 %s42, 1
        %s396 = sand.u32 %s170, 1
        %s397 = scalar_lea.sflag [#allocation8], %s396
        %s398 = sand.u32 %s170, 1
        %s399 = smul.addr %s398, 16
        %s400 = scalar_lea.vmem [#allocation7], %s399
        // Predicated region
        $region49: #{tpu_custom_call.1} parent=47 // pred_check
          %p401 = pneg %p183
        $region50: #{tpu_custom_call.1} parent=47 // pred_check_branch
          %403 = sbr.rel (%p401) target = $region52
        $region51: #{tpu_custom_call.1} parent=47 // pred_region
          %404 = dma.done %s397, 256
        $region52: #{tpu_custom_call.1} parent=47 // pred_fallthru
          _
        // Predicated region
        $region53: #{tpu_custom_call.1} parent=47 // pred_check
          %p405 = pneg %p230
        $region54: #{tpu_custom_call.1} parent=47 // pred_check_branch
          %407 = sbr.rel (%p405) target = $region56
        $region55: #{tpu_custom_call.1} parent=47 // pred_region
          %408 = dma.done [#allocation11], 1024
        $region56: #{tpu_custom_call.1} parent=47 // pred_fallthru
          _
        %s409 = sadd.s32 %s52, %s53
        %s410 = smul.u32 %s409, 3
        %s411 = sadd.s32 %s410, %s54
        %s412 = sld [smem:[#allocation4 + %s411]]
        %s413 = sld [smem:[#allocation5 + %s411]]
        %s414 = sld [smem:[#allocation6 + %s411]]
        %p415 = scmp.lt.s32.totalorder %s412, 2
        %s416 = scalar_select %p415, %s412, 2
        %p417 = scmp.lt.s32.totalorder %s413, 3
        %s418 = scalar_select %p417, %s413, 3
        %p419 = scmp.lt.s32.totalorder %s414, 0
        %s420 = scalar_select %p419, %s414, 0
        %s421 = sadd.s32 %s420, %s418
        %s422 = smul.addr %s416, 4
        %s423 = sadd.s32 %s421, %s422
        %s424 = smul.addr %s423, 8
        %s425 = scalar_lea.vmem %s4, %s424
        %p426 = pneg %p103
        %p427 = pneg %p100
        %s428 = smul.u32 4, %s52
        %p429 = scmp.lt.s32.totalorder %s54, 2
        %s430 = scalar_select %p429, %s54, 2
        %p431 = scmp.lt.s32.totalorder %s428, 15
        %s432 = scalar_select %p431, %s428, 15
        %s433 = smul.addr %s430, 16
        %s434 = sadd.s32 %s432, %s433
        %s435 = smul.addr %s434, 8
        %s436 = scalar_lea.vmem %s5, %s435
        %p437 = pneg %p131
        %p438 = pneg %p128
        %s439 = smul.u32 16, %s53
        %p440 = scmp.lt.s32.totalorder %s439, 15
        %s441 = scalar_select %p440, %s439, 15
        %s442 = smul.addr %s441, 4
        %s443 = scalar_lea.vmem %s6, %s442
        %p444 = pneg %p157
        %p445 = pneg %p154
        %s446 = sand.u32 %s170, 1
        %s447 = scalar_lea.sflag [#allocation8], %s446
        %s448 = sand.u32 %s170, 1
        %s449 = smul.addr %s448, 16
        %s450 = scalar_lea.vmem [#allocation7], %s449
        %p451 = pneg %p183
        %p452 = pneg %p180
        %p453 = scmp.lt.s32.totalorder %s54, 2
        %s454 = scalar_select %p453, %s54, 2
        %s455 = smul.addr %s454, 16
        %s456 = smul.addr %s455, 4
        %s457 = scalar_lea.vmem %s8, %s456
        %p458 = pneg %p209
        %p459 = pneg %p206
        %p460 = pneg %p230
        %p461 = pneg %p227
        %p462 = pneg %p251
        %p463 = pneg %p248
        %p464 = pneg %p277
        %p465 = pneg %p274
        %s466 = sand.u32 %s264, 1
        %s467 = scalar_lea.sflag [#allocation9], %s466
        %s468 = sand.u32 %s264, 1
        %s469 = smul.addr %s468, 32
        %s470 = scalar_lea.vmem [#allocation12], %s469
        %s471 = sadd.s32 %s52, %s53
        %s472 = smul.u32 %s471, 3
        %s473 = sadd.s32 %s472, %s54
        %s474 = sld [smem:[#allocation4 + %s473]]
        %s475 = sld [smem:[#allocation5 + %s473]]
        %s476 = sld [smem:[#allocation6 + %s473]]
        %p477 = scmp.lt.s32.totalorder %s474, 2
        %s478 = scalar_select %p477, %s474, 2
        %p479 = scmp.lt.s32.totalorder %s475, 3
        %s480 = scalar_select %p479, %s475, 3
        %p481 = scmp.lt.s32.totalorder %s476, 0
        %s482 = scalar_select %p481, %s476, 0
        %s483 = sadd.s32 %s482, %s480
        %s484 = smul.addr %s478, 4
        %s485 = sadd.s32 %s483, %s484
        %s486 = smul.addr %s485, 8
        %s487 = scalar_lea.vmem %s4, %s486
        %s488 = sadd.s32 %s52, %s53
        %s489 = smul.u32 %s488, 3
        %s490 = sadd.s32 %s489, %s54
        %s491 = sld [smem:[#allocation4 + %s490]]
        %s492 = sld [smem:[#allocation5 + %s490]]
        %s493 = sld [smem:[#allocation6 + %s490]]
        %s494 = smul.u32 4, %s52
        %p495 = scmp.lt.s32.totalorder %s54, 2
        %s496 = scalar_select %p495, %s54, 2
        %p497 = scmp.lt.s32.totalorder %s494, 15
        %s498 = scalar_select %p497, %s494, 15
        %s499 = smul.addr %s496, 16
        %s500 = sadd.s32 %s498, %s499
        %s501 = smul.addr %s500, 8
        %s502 = scalar_lea.vmem %s5, %s501
        %s503 = smul.u32 4, %s52
        %s504 = smul.u32 16, %s53
        %p505 = scmp.lt.s32.totalorder %s504, 15
        %s506 = scalar_select %p505, %s504, 15
        %s507 = smul.addr %s506, 4
        %s508 = scalar_lea.vmem %s6, %s507
        %s509 = smul.u32 16, %s53
        %s510 = smul.u32 4, %s52
        %p511 = scmp.lt.s32.totalorder %s54, 2
        %s512 = scalar_select %p511, %s54, 2
        %s513 = smul.addr %s512, 16
        %s514 = smul.addr %s513, 4
        %s515 = scalar_lea.vmem %s8, %s514
        %s516 = smul.u32 4, %s52
        %p518 = scmp.eq.s32.totalorder %s53, 0
        %p519 = scmp.eq.s32.totalorder %s54, 0
        %p520 = pnand %p518, %p519
        %p521 = pneg %p520
        // Predicated region
        $region57: #{tpu_custom_call.1} parent=47 // pred_check
          _
        $region58: #{tpu_custom_call.1} parent=47 // pred_check_branch
          %523 = sbr.rel (%p520) target = $region60
        $region59: #{tpu_custom_call.1} parent=47 // pred_region
          %v524 = vld [vmem:[%s400] sm:$0xf]
          %v525 = vld [vmem:[%s400 + $0x4] sm:$0xf]
          %v526 = vld [vmem:[%s400 + $0x8] sm:$0xf]
          %v527 = vld [vmem:[%s400 + $0xc] sm:$0xf]
          %v528 = vld [vmem:[#allocation10] sm:$0xf]
          %v529 = vld [vmem:[#allocation10 + $0x4] sm:$0xf]
          %v530 = vld [vmem:[#allocation10 + $0x8] sm:$0xf]
          %v531 = vld [vmem:[#allocation10 + $0xc] sm:$0xf]
          %v532 = vld [vmem:[#allocation10 + $0x10] sm:$0xf]
          %v533 = vld [vmem:[#allocation10 + $0x14] sm:$0xf]
          %v534 = vld [vmem:[#allocation10 + $0x18] sm:$0xf]
          %v535 = vld [vmem:[#allocation10 + $0x1c] sm:$0xf]
          %v536 = vld [vmem:[#allocation10 + $0x20] sm:$0xf]
          %v537 = vld [vmem:[#allocation10 + $0x24] sm:$0xf]
          %v538 = vld [vmem:[#allocation10 + $0x28] sm:$0xf]
          %v539 = vld [vmem:[#allocation10 + $0x2c] sm:$0xf]
          %v540 = vld [vmem:[#allocation10 + $0x30] sm:$0xf]
          %v541 = vld [vmem:[#allocation10 + $0x34] sm:$0xf]
          %v542 = vld [vmem:[#allocation10 + $0x38] sm:$0xf]
          %v543 = vld [vmem:[#allocation10 + $0x3c] sm:$0xf]
          %v544 = vld [vmem:[%s10] sm:$0x1]
          %v546 = vlaneseq
          %v547 = vshrl.u32 %v546, 7
          %v548 = vsub.s32 0, %v547
          %v549 = vrot.slane %v544, %v548
          %v555 = vunpack.c.l.b16 %v524
          %v556 = vunpack.c.l.b16 %v525
          %v557 = vunpack.c.l.b16 %v526
          %v558 = vunpack.c.l.b16 %v527
          %v559 = vpack.c.b16 %v556, %v555
          %v560 = vpack.c.b16 %v558, %v557
          %v579 = vunpack.c.l.b16 %v528
          %v580 = vunpack.c.l.b16 %v529
          %v581 = vunpack.c.l.b16 %v530
          %v582 = vunpack.c.l.b16 %v531
          %v583 = vunpack.c.l.b16 %v532
          %v584 = vunpack.c.l.b16 %v533
          %v585 = vunpack.c.l.b16 %v534
          %v586 = vunpack.c.l.b16 %v535
          %v587 = vunpack.c.l.b16 %v536
          %v588 = vunpack.c.l.b16 %v537
          %v589 = vunpack.c.l.b16 %v538
          %v590 = vunpack.c.l.b16 %v539
          %v591 = vunpack.c.l.b16 %v540
          %v592 = vunpack.c.l.b16 %v541
          %v593 = vunpack.c.l.b16 %v542
          %v594 = vunpack.c.l.b16 %v543
          %v595 = vpack.c.b16 %v580, %v579
          %v596 = vpack.c.b16 %v582, %v581
          %v597 = vpack.c.b16 %v584, %v583
          %v598 = vpack.c.b16 %v586, %v585
          %v599 = vpack.c.b16 %v588, %v587
          %v600 = vpack.c.b16 %v590, %v589
          %v601 = vpack.c.b16 %v592, %v591
          %v602 = vpack.c.b16 %v594, %v593
          %611 = vmatprep.subr.bf16.mxu0 0
          %612 = vmatpush1.bf16.msra.mxu0 %v602
          %613 = vmatprep.subr.bf16.mxu0 0
          %614 = vmatpush1.bf16.msra.mxu0 %v601
          %615 = vmatprep.subr.bf16.mxu0 0
          %616 = vmatpush1.bf16.msra.mxu0 %v600
          %617 = vmatprep.subr.bf16.mxu0 0
          %618 = vmatpush1.bf16.msra.mxu0 %v599
          %619 = vmatprep.subr.bf16.mxu0 0
          %620 = vmatpush1.bf16.msra.mxu0 %v598
          %621 = vmatprep.subr.bf16.mxu0 0
          %622 = vmatpush1.bf16.msra.mxu0 %v597
          %623 = vmatprep.subr.bf16.mxu0 0
          %624 = vmatpush1.bf16.msra.mxu0 %v596
          %625 = vmatprep.subr.bf16.mxu0 0
          %626 = vmatpush1.bf16.msra.mxu0 %v595
          %627 = vmatprep.subr.bf16.mxu0 0
          %628 = vmatpush2.bf16.msra.mxu0 0
          %629 = vmatprep.subr.bf16.mxu0 0
          %630 = vmatpush2.bf16.msra.mxu0 0
          %631 = vmatprep.subr.bf16.mxu0 0
          %632 = vmatpush2.bf16.msra.mxu0 0
          %633 = vmatprep.subr.bf16.mxu0 0
          %634 = vmatpush2.bf16.msra.mxu0 0
          %635 = vmatprep.subr.bf16.mxu0 0
          %636 = vmatpush2.bf16.msra.mxu0 0
          %637 = vmatprep.subr.bf16.mxu0 0
          %638 = vmatpush2.bf16.msra.mxu0 0
          %639 = vmatprep.subr.bf16.mxu0 0
          %640 = vmatpush2.bf16.msra.mxu0 0
          %641 = vmatprep.subr.bf16.mxu0 0
          %642 = vmatpush2.bf16.msra.mxu0 0
          %643 = vmatprep.mubr.bf16.mxu0 0
          %644 = vmatmul.mubr.bf16.gmra.mxu0 %v559
          %v645 = vpop.f32.mrf.mxu0
          %v646 = vadd.f32 %v549, %v645
          %v647 = vpop.f32.mrf.mxu0
          %v648 = vpop.f32.mrf.mxu0
          %v649 = vadd.f32 %v549, %v648
          %v650 = vpop.f32.mrf.mxu0
          %651 = vmatprep.mubr.bf16.mxu0 0
          %652 = vmatmul.mubr.bf16.gmra.mxu0 %v560
          %v653 = vpop.f32.mrf.mxu0
          %v654 = vadd.f32 %v549, %v653
          %v655 = vpop.f32.mrf.mxu0
          %v656 = vpop.f32.mrf.mxu0
          %v657 = vadd.f32 %v549, %v656
          %v658 = vpop.f32.mrf.mxu0
          %659 = vdwg.mxu0
          %660 = vst [vmem:[%s470] sm:$0xff] %v646
          %661 = vst [vmem:[%s470 + $0x8] sm:$0xff] %v649
          %662 = vst [vmem:[%s470 + $0x10] sm:$0xff] %v654
          %663 = vst [vmem:[%s470 + $0x18] sm:$0xff] %v657
        $region60: #{tpu_custom_call.1} parent=47 // pred_fallthru
          _
        %s664 = sadd.s32 %s52, %s53
        %s665 = smul.u32 %s664, 3
        %s666 = sadd.s32 %s665, %s54
        %s667 = sld [smem:[#allocation3 + %s666]]
        %p668 = scmp.ne.s32.totalorder %s667, 0
        // Predicated region
        $region61: #{tpu_custom_call.1} parent=47 // pred_check
          %p669 = pneg %p668
        $region62: #{tpu_custom_call.1} parent=47 // pred_check_branch
          %671 = sbr.rel (%p669) target = $region64
        $region63: #{tpu_custom_call.1} parent=47 // pred_region
          %v672 = vld [vmem:[%s487] sm:$0xff]
          %v673 = vunpack.c.l.s8.bf16 %v672
          %v674 = vunpack.c.h.s8.bf16 %v672
          %v675 = vld [vmem:[%s508] sm:$0xf]
          %v676 = vld [vmem:[%s508 + $0x4] sm:$0xf]
          %v677 = vld [vmem:[%s508 + $0x8] sm:$0xf]
          %v678 = vld [vmem:[%s508 + $0xc] sm:$0xf]
          %v679 = vld [vmem:[%s508 + $0x10] sm:$0xf]
          %v680 = vld [vmem:[%s508 + $0x14] sm:$0xf]
          %v681 = vld [vmem:[%s508 + $0x18] sm:$0xf]
          %v682 = vld [vmem:[%s508 + $0x1c] sm:$0xf]
          %v683 = vld [vmem:[%s508 + $0x20] sm:$0xf]
          %v684 = vld [vmem:[%s508 + $0x24] sm:$0xf]
          %v685 = vld [vmem:[%s508 + $0x28] sm:$0xf]
          %v686 = vld [vmem:[%s508 + $0x2c] sm:$0xf]
          %v687 = vld [vmem:[%s508 + $0x30] sm:$0xf]
          %v688 = vld [vmem:[%s508 + $0x34] sm:$0xf]
          %v689 = vld [vmem:[%s508 + $0x38] sm:$0xf]
          %v690 = vld [vmem:[%s508 + $0x3c] sm:$0xf]
          %v707 = vunpack.c.l.b16 %v675
          %v708 = vunpack.c.l.b16 %v676
          %v709 = vunpack.c.l.b16 %v677
          %v710 = vunpack.c.l.b16 %v678
          %v711 = vunpack.c.l.b16 %v679
          %v712 = vunpack.c.l.b16 %v680
          %v713 = vunpack.c.l.b16 %v681
          %v714 = vunpack.c.l.b16 %v682
          %v715 = vunpack.c.l.b16 %v683
          %v716 = vunpack.c.l.b16 %v684
          %v717 = vunpack.c.l.b16 %v685
          %v718 = vunpack.c.l.b16 %v686
          %v719 = vunpack.c.l.b16 %v687
          %v720 = vunpack.c.l.b16 %v688
          %v721 = vunpack.c.l.b16 %v689
          %v722 = vunpack.c.l.b16 %v690
          %v723 = vpack.c.b16 %v708, %v707
          %v724 = vpack.c.b16 %v710, %v709
          %v725 = vpack.c.b16 %v712, %v711
          %v726 = vpack.c.b16 %v714, %v713
          %v727 = vpack.c.b16 %v716, %v715
          %v728 = vpack.c.b16 %v718, %v717
          %v729 = vpack.c.b16 %v720, %v719
          %v730 = vpack.c.b16 %v722, %v721
          %739 = vmatprep.subr.bf16.mxu0 0
          %740 = vmatpush1.bf16.msra.mxu0 %v730
          %741 = vmatprep.subr.bf16.mxu0 0
          %742 = vmatpush1.bf16.msra.mxu0 %v729
          %743 = vmatprep.subr.bf16.mxu0 0
          %744 = vmatpush1.bf16.msra.mxu0 %v728
          %745 = vmatprep.subr.bf16.mxu0 0
          %746 = vmatpush1.bf16.msra.mxu0 %v727
          %747 = vmatprep.subr.bf16.mxu0 0
          %748 = vmatpush1.bf16.msra.mxu0 %v726
          %749 = vmatprep.subr.bf16.mxu0 0
          %750 = vmatpush1.bf16.msra.mxu0 %v725
          %751 = vmatprep.subr.bf16.mxu0 0
          %752 = vmatpush1.bf16.msra.mxu0 %v724
          %753 = vmatprep.subr.bf16.mxu0 0
          %754 = vmatpush1.bf16.msra.mxu0 %v723
          %755 = vmatprep.subr.bf16.mxu0 0
          %756 = vmatpush2.bf16.msra.mxu0 0
          %757 = vmatprep.subr.bf16.mxu0 0
          %758 = vmatpush2.bf16.msra.mxu0 0
          %759 = vmatprep.subr.bf16.mxu0 0
          %760 = vmatpush2.bf16.msra.mxu0 0
          %761 = vmatprep.subr.bf16.mxu0 0
          %762 = vmatpush2.bf16.msra.mxu0 0
          %763 = vmatprep.subr.bf16.mxu0 0
          %764 = vmatpush2.bf16.msra.mxu0 0
          %765 = vmatprep.subr.bf16.mxu0 0
          %766 = vmatpush2.bf16.msra.mxu0 0
          %767 = vmatprep.subr.bf16.mxu0 0
          %768 = vmatpush2.bf16.msra.mxu0 0
          %769 = vmatprep.subr.bf16.mxu0 0
          %770 = vmatpush2.bf16.msra.mxu0 0
          %771 = vmatprep.mubr.bf16.mxu0 0
          %772 = vmatmul.mubr.bf16.gmra.mxu0 %v673
          %v773 = vpop.f32.mrf.mxu0
          %v774 = vadd.f32 0.0, %v773
          %v775 = vpop.f32.mrf.mxu0
          %v776 = vpop.f32.mrf.mxu0
          %v777 = vadd.f32 0.0, %v776
          %v778 = vpop.f32.mrf.mxu0
          %779 = vmatprep.mubr.bf16.mxu0 0
          %780 = vmatmul.mubr.bf16.gmra.mxu0 %v674
          %v781 = vpop.f32.mrf.mxu0
          %v782 = vadd.f32 0.0, %v781
          %v783 = vpop.f32.mrf.mxu0
          %v784 = vpop.f32.mrf.mxu0
          %v785 = vadd.f32 0.0, %v784
          %v786 = vpop.f32.mrf.mxu0
          %787 = vdwg.mxu0
          %v788 = vld [vmem:[%s470] sm:$0xff]
          %v789 = vld [vmem:[%s470 + $0x8] sm:$0xff]
          %v790 = vld [vmem:[%s470 + $0x10] sm:$0xff]
          %v791 = vld [vmem:[%s470 + $0x18] sm:$0xff]
          %v792 = vpack.c.bf16 %v777, %v774
          %v793 = vpack.c.bf16 %v785, %v782
          %v794 = vld [vmem:[%s515] sm:$0xf]
          %v795 = vld [vmem:[%s515 + $0x4] sm:$0xf]
          %v796 = vld [vmem:[%s515 + $0x8] sm:$0xf]
          %v797 = vld [vmem:[%s515 + $0xc] sm:$0xf]
          %v798 = vld [vmem:[%s515 + $0x10] sm:$0xf]
          %v799 = vld [vmem:[%s515 + $0x14] sm:$0xf]
          %v800 = vld [vmem:[%s515 + $0x18] sm:$0xf]
          %v801 = vld [vmem:[%s515 + $0x1c] sm:$0xf]
          %v802 = vld [vmem:[%s515 + $0x20] sm:$0xf]
          %v803 = vld [vmem:[%s515 + $0x24] sm:$0xf]
          %v804 = vld [vmem:[%s515 + $0x28] sm:$0xf]
          %v805 = vld [vmem:[%s515 + $0x2c] sm:$0xf]
          %v806 = vld [vmem:[%s515 + $0x30] sm:$0xf]
          %v807 = vld [vmem:[%s515 + $0x34] sm:$0xf]
          %v808 = vld [vmem:[%s515 + $0x38] sm:$0xf]
          %v809 = vld [vmem:[%s515 + $0x3c] sm:$0xf]
          %v826 = vunpack.c.l.b16 %v794
          %v827 = vunpack.c.l.b16 %v795
          %v828 = vunpack.c.l.b16 %v796
          %v829 = vunpack.c.l.b16 %v797
          %v830 = vunpack.c.l.b16 %v798
          %v831 = vunpack.c.l.b16 %v799
          %v832 = vunpack.c.l.b16 %v800
          %v833 = vunpack.c.l.b16 %v801
          %v834 = vunpack.c.l.b16 %v802
          %v835 = vunpack.c.l.b16 %v803
          %v836 = vunpack.c.l.b16 %v804
          %v837 = vunpack.c.l.b16 %v805
          %v838 = vunpack.c.l.b16 %v806
          %v839 = vunpack.c.l.b16 %v807
          %v840 = vunpack.c.l.b16 %v808
          %v841 = vunpack.c.l.b16 %v809
          %v842 = vpack.c.b16 %v827, %v826
          %v843 = vpack.c.b16 %v829, %v828
          %v844 = vpack.c.b16 %v831, %v830
          %v845 = vpack.c.b16 %v833, %v832
          %v846 = vpack.c.b16 %v835, %v834
          %v847 = vpack.c.b16 %v837, %v836
          %v848 = vpack.c.b16 %v839, %v838
          %v849 = vpack.c.b16 %v841, %v840
          %858 = vmatprep.subr.bf16.mxu0 0
          %859 = vmatpush1.bf16.msra.mxu0 %v849
          %860 = vmatprep.subr.bf16.mxu0 0
          %861 = vmatpush1.bf16.msra.mxu0 %v848
          %862 = vmatprep.subr.bf16.mxu0 0
          %863 = vmatpush1.bf16.msra.mxu0 %v847
          %864 = vmatprep.subr.bf16.mxu0 0
          %865 = vmatpush1.bf16.msra.mxu0 %v846
          %866 = vmatprep.subr.bf16.mxu0 0
          %867 = vmatpush1.bf16.msra.mxu0 %v845
          %868 = vmatprep.subr.bf16.mxu0 0
          %869 = vmatpush1.bf16.msra.mxu0 %v844
          %870 = vmatprep.subr.bf16.mxu0 0
          %871 = vmatpush1.bf16.msra.mxu0 %v843
          %872 = vmatprep.subr.bf16.mxu0 0
          %873 = vmatpush1.bf16.msra.mxu0 %v842
          %874 = vmatprep.subr.bf16.mxu0 0
          %875 = vmatpush2.bf16.msra.mxu0 0
          %876 = vmatprep.subr.bf16.mxu0 0
          %877 = vmatpush2.bf16.msra.mxu0 0
          %878 = vmatprep.subr.bf16.mxu0 0
          %879 = vmatpush2.bf16.msra.mxu0 0
          %880 = vmatprep.subr.bf16.mxu0 0
          %881 = vmatpush2.bf16.msra.mxu0 0
          %882 = vmatprep.subr.bf16.mxu0 0
          %883 = vmatpush2.bf16.msra.mxu0 0
          %884 = vmatprep.subr.bf16.mxu0 0
          %885 = vmatpush2.bf16.msra.mxu0 0
          %886 = vmatprep.subr.bf16.mxu0 0
          %887 = vmatpush2.bf16.msra.mxu0 0
          %888 = vmatprep.subr.bf16.mxu0 0
          %889 = vmatpush2.bf16.msra.mxu0 0
          %890 = vmatprep.mubr.bf16.mxu0 0
          %891 = vmatmul.mubr.bf16.gmra.mxu0 %v792
          %v892 = vpop.f32.mrf.mxu0
          %v893 = vadd.f32 0.0, %v892
          %v894 = vpop.f32.mrf.mxu0
          %v895 = vpop.f32.mrf.mxu0
          %v896 = vadd.f32 0.0, %v895
          %v897 = vpop.f32.mrf.mxu0
          %898 = vmatprep.mubr.bf16.mxu0 0
          %899 = vmatmul.mubr.bf16.gmra.mxu0 %v793
          %v900 = vpop.f32.mrf.mxu0
          %v901 = vadd.f32 0.0, %v900
          %v902 = vpop.f32.mrf.mxu0
          %v903 = vpop.f32.mrf.mxu0
          %v904 = vadd.f32 0.0, %v903
          %v905 = vpop.f32.mrf.mxu0
          %906 = vdwg.mxu0
          %v907 = vld [vmem:[%s502] sm:$0xff]
          %v908 = vld [vmem:[%s502 + $0x8] sm:$0xff]
          %v909 = vld [vmem:[%s502 + $0x10] sm:$0xff]
          %v910 = vld [vmem:[%s502 + $0x18] sm:$0xff]
          %912 = vset.pattern.permute.xlu0 0
          %913 = vperm.xlu0 %912, %v907
          %v914 = vpop.permute.xlu0 %913
          %917 = vset.pattern.permute.xlu0 0
          %918 = vperm.xlu0 %917, %v908
          %v919 = vpop.permute.xlu0 %918
          %922 = vset.pattern.permute.xlu0 0
          %923 = vperm.xlu0 %922, %v909
          %v924 = vpop.permute.xlu0 %923
          %927 = vset.pattern.permute.xlu0 0
          %928 = vperm.xlu0 %927, %v910
          %v929 = vpop.permute.xlu0 %928
          %v931 = vmul.f32 %v893, %v914
          %v932 = vmul.f32 %v896, %v919
          %v933 = vmul.f32 %v901, %v924
          %v934 = vmul.f32 %v904, %v929
          %v935 = vadd.f32 %v788, %v931
          %v936 = vadd.f32 %v789, %v932
          %v937 = vadd.f32 %v790, %v933
          %v938 = vadd.f32 %v791, %v934
          %939 = vst [vmem:[%s470] sm:$0xff] %v935
          %940 = vst [vmem:[%s470 + $0x8] sm:$0xff] %v936
          %941 = vst [vmem:[%s470 + $0x10] sm:$0xff] %v937
          %942 = vst [vmem:[%s470 + $0x18] sm:$0xff] %v938
        $region64: #{tpu_custom_call.1} parent=47 // pred_fallthru
          _
        %p943 = scmp.eq.s32.totalorder %s54, 2
        %p944 = pnand %p518, %p943
        %p945 = pneg %p944
        // Predicated region
        $region65: #{tpu_custom_call.1} parent=47 // pred_check
          _
        $region66: #{tpu_custom_call.1} parent=47 // pred_check_branch
          %947 = sbr.rel (%p944) target = $region68
        $region67: #{tpu_custom_call.1} parent=47 // pred_region
          %v948 = vld [vmem:[%s470] sm:$0xff]
          %v949 = vld [vmem:[%s470 + $0x8] sm:$0xff]
          %v950 = vld [vmem:[%s470 + $0x10] sm:$0xff]
          %v951 = vld [vmem:[%s470 + $0x18] sm:$0xff]
          %v952 = vmax.f32 %v948, 0.0
          %v953 = vmax.f32 %v949, 0.0
          %v954 = vmax.f32 %v950, 0.0
          %v955 = vmax.f32 %v951, 0.0
          %956 = vst [vmem:[%s470] sm:$0xff] %v952
          %957 = vst [vmem:[%s470 + $0x8] sm:$0xff] %v953
          %958 = vst [vmem:[%s470 + $0x10] sm:$0xff] %v954
          %959 = vst [vmem:[%s470 + $0x18] sm:$0xff] %v955
        $region68: #{tpu_custom_call.1} parent=47 // pred_fallthru
          _
        %s960 = sand.u32 %s264, 1
        %s961 = scalar_lea.sflag [#allocation9], %s960
        %s962 = sand.u32 %s264, 1
        %s963 = smul.addr %s962, 32
        %s964 = scalar_lea.vmem [#allocation12], %s963
        // Predicated region
        $region69: #{tpu_custom_call.1} parent=47 // pred_check
          %p965 = pneg %p274
        $region70: #{tpu_custom_call.1} parent=47 // pred_check_branch
          %967 = sbr.rel (%p965) target = $region72
        $region71: #{tpu_custom_call.1} parent=47 // pred_region
          %s968 = smul.u32 4, %s52
          %s970 = ssub.s32 512, 512
          %971 = vsyncadd %s961, %s970
          %s972 = smul.addr %s968, 128
          %s973 = scalar_lea.hbm %s11, %s972
          %s974 = sshll.u32 %s964, 4
          %s975 = int_to_ptr.vmem [resolvable:$true] %s974
          %980 = dma.vmem_to_hbm [thread:$0]  %s975, 512, %s973, %s961, 128, 128, 8
        $region72: #{tpu_custom_call.1} parent=47 // pred_fallthru
          _
      $region48: #{tpu_custom_call.1} parent=5 // pred_fallthru
        _
      %p981 = scmp.le.s32.totalorder 2, %s42
      // Predicated region
      $region73: #{tpu_custom_call.1} parent=5 // pred_check
        %p982 = pneg %p981
      $region74: #{tpu_custom_call.1} parent=5 // pred_check_branch
        %984 = sbr.rel (%p982) target = $region76
      $region75: #{tpu_custom_call.1} parent=5 // pred_region
        %s985 = ssub.s32 %s42, 2
        // Predicated region
        $region77: #{tpu_custom_call.1} parent=75 // pred_check
          %p986 = pneg %p280
        $region78: #{tpu_custom_call.1} parent=75 // pred_check_branch
          %988 = sbr.rel (%p986) target = $region80
        $region79: #{tpu_custom_call.1} parent=75 // pred_region
          %s989 = sand.u32 %s265, 1
          %s990 = scalar_lea.sflag [#allocation9], %s989
          %s991 = sand.u32 %s265, 1
          %s992 = smul.addr %s991, 32
          %s993 = scalar_lea.vmem [#allocation12], %s992
          %994 = dma.done %s990, 512
        $region80: #{tpu_custom_call.1} parent=75 // pred_fallthru
          _
      $region76: #{tpu_custom_call.1} parent=5 // pred_fallthru
        _
    $region6: #{tpu_custom_call.1} parent=1 // loop_footer
      %s46 = sadd.s32 1, %s42
    $region7: #{tpu_custom_call.1} parent=1 // loop_footer_branch
      %41 = sbr.rel target = $region3
    $region8: #{tpu_custom_call.1} parent=1 // loop_exit
      _
    %995 = vsyncpa [#allocation8], 1
    %s996 = scalar_lea.sflag [#allocation8], 1
    %997 = vsyncpa %s996, 1
    %998 = vsyncpa [#allocation11], 1
    %999 = vsyncpa [#allocation9], 1
    %s1000 = scalar_lea.sflag [#allocation9], 1
    %1001 = vsyncpa %s1000, 1

</llo_original>
